<compile_context>
chip_gen: v7x
topology: tpu7x:2x2x1
jax: 0.10.0
libtpu: 0.0.40
codegen_flags: <defaults>
</compile_context>

<pallas_src>
import math
import jax
import jax.numpy as jnp
from jax.experimental import pallas as pl
from jax.experimental.pallas import tpu as pltpu


def _masked_edge_attn_kernel(m_ref, w_ref, mc_ref, out_ref):
    # m_ref : (L, Dp)   f32  -- M[:, b, :] for this grid step's dialogue b
    # w_ref : (MAXL,Dp) f32  -- Linear weight, resident across grid steps
    # mc_ref: (MAXL, L) int8 -- edge indicator for dialogue b
    # out   : (MAXL, L) f32
    #
    # One MXU matmul per dialogue:
    #   s[u, l] = <W[u], M[l, b]>  == nn.Linear(bias=False)(M)[l, b, u],
    # already in the permuted (max_seq_len, seq_len) orientation of the output.
    s = jax.lax.dot_general(
        w_ref[...], m_ref[...], (((1,), (1,)), ((), ())),
        preferred_element_type=jnp.float32)                      # (MAXL, L)

    # softmax over seq_len (dim 0 of the original (L, B, MAXL) tensor); its 1/Z
    # cancels against the masked renormalization below, so only exp(s - rowmax)
    # is needed.
    e = jnp.exp(s - jnp.max(s, axis=-1, keepdims=True))          # un-normalized softmax

    mc = mc_ref[...].astype(jnp.float32)                         # exact {0.0, 1.0}
    # (mc + 1e-10) == where(mc == 1, 1.0, 1e-10) in f32 because 1 + 1e-10 rounds
    # to 1.0; requires mask_copy to be exactly {0,1} (it is) and f32 math.
    masked = e * (mc + 1e-10)                                    # alpha*mask, up to 1/Z
    sums = jnp.sum(masked, axis=-1, keepdims=True)               # (MAXL, 1)
    inv = pl.reciprocal(sums, approx=True)                       # EUP reciprocal
    inv = inv * (2.0 - sums * inv)                               # Newton step -> ~f32 exact
    out_ref[...] = masked * inv * mc


def masked_edge_attention(M, W, mask_copy):
    """M: (L, B, D) f32, W: (MAXL, D) f32, mask_copy: (B, MAXL, L) with exact
    {0, 1} values (int8 recommended to cut HBM traffic) -> (B, MAXL, L) f32."""
    L, B, D = M.shape
    MAXL = W.shape[0]

    # Zero-pad the contraction dim to a lane multiple so each dialogue's (L, D)
    # slice is a lane-aligned column block of the fused (L, B*Dp) view.  Zero
    # padding does not change any dot product.  (At the toy D=128 this is a
    # no-op; the fused-view reshape costs at most one relayout outside the
    # kernel — at production, keep the features in this layout to make it free.)
    Dp = ((D + 127) // 128) * 128
    if Dp != D:
        M = jnp.pad(M, ((0, 0), (0, 0), (0, Dp - D)))
        W = jnp.pad(W, ((0, 0), (0, Dp - D)))
    M2 = M.reshape(L, B * Dp)

    return pl.pallas_call(
        _masked_edge_attn_kernel,
        out_shape=jax.ShapeDtypeStruct((B, MAXL, L), jnp.float32),
        grid=(B,),
        in_specs=[
            # M[:, b, :] delivered by the BlockSpec DMA (no in-kernel gather).
            pl.BlockSpec((L, Dp), lambda b: (0, b)),
            # W: same block every step -> fetched once, stays resident in VMEM.
            pl.BlockSpec((MAXL, Dp), lambda b: (0, 0)),
            # Edge-indicator slice for dialogue b (int8, squeezed leading dim).
            pl.BlockSpec((None, MAXL, L), lambda b: (b, 0, 0)),
        ],
        out_specs=pl.BlockSpec((None, MAXL, L), lambda b: (b, 0, 0)),
        compiler_params=pltpu.CompilerParams(
            dimension_semantics=("parallel",)),   # both TCs on v7x; no-op v5e/v6e
    )(M2, W, mask_copy)


def masked_edge_attention_ref(M, W, mask_copy):
    """Pure-JAX reference mirroring the PyTorch code line by line."""
    scale = jnp.einsum("lbd,md->lbm", M, W)                      # (L, B, MAXL)
    alpha = jax.nn.softmax(scale, axis=0)
    alpha = jnp.transpose(alpha, (1, 2, 0))                      # (B, MAXL, L)
    mc = mask_copy.astype(jnp.float32)
    mask = jnp.where(mc == 1.0, 1.0, 1e-10)
    masked_alpha = alpha * mask
    sums = masked_alpha.sum(-1, keepdims=True)
    return masked_alpha / sums * mc


if __name__ == "__main__":
    # Small shapes consistent with the module:
    #   M -> (seq_len, batch, input_dim), seq_len == max_seq_len.
    # input_dim = 128 (small, lane-aligned hidden size typical of DialogueGCN).
    L = 16          # seq_len == max_seq_len
    B = 2           # batch
    D = 128         # input_dim
    MAXL = L

    key = jax.random.PRNGKey(0)
    k_m, k_w = jax.random.split(key)
    M = jax.random.normal(k_m, (L, B, D), dtype=jnp.float32)
    # deterministic init of the scalar Linear weight (max_seq_len, input_dim)
    stdv = 1.0 / math.sqrt(D)
    W = jax.random.uniform(k_w, (MAXL, D), dtype=jnp.float32,
                           minval=-stdv, maxval=stdv)

    # build edge_ind: per dialogue, edges (u, v) with |u - v| <= 2 within length
    lengths = [16, 12]
    edge_ind = [
        [(u, v) for u in range(lengths[j]) for v in range(lengths[j])
         if abs(u - v) <= 2]
        for j in range(B)
    ]
    js, us, vs = [], [], []
    for j, perms in enumerate(edge_ind):
        for u, v in perms:
            js.append(j); us.append(u); vs.append(v)
    # mask_copy built directly as int8 {0,1} (4x smaller than f32 in HBM).
    mask_copy = jnp.zeros((B, MAXL, L), jnp.int8).at[
        jnp.array(js), jnp.array(us), jnp.array(vs)].set(1)

    scores = masked_edge_attention(M, W, mask_copy)
    scores = jax.block_until_ready(scores)

    ref = masked_edge_attention_ref(M, W, mask_copy)
    assert scores.shape == (B, MAXL, L)
    assert jnp.allclose(scores, ref, atol=5e-5, rtol=1e-4), "mismatch vs reference"
    print("KERNEL_OK")
</pallas_src>

<mosaic_0001>
module attributes {stable_mosaic.version = 11 : i64} {
  func.func @_masked_edge_attn_kernel(%arg0: i32, %arg1: memref<16x128xf32, #tpu.memory_space<vmem>>, %arg2: memref<16x128xf32, #tpu.memory_space<vmem>>, %arg3: memref<1x16x16xi8, #tpu.memory_space<vmem>>, %arg4: memref<1x16x16xf32, #tpu.memory_space<vmem>>) attributes {dimension_semantics = [#tpu.dimension_semantics<parallel>], iteration_bounds = array<i64: 2>, scalar_prefetch = 0 : i64, scratch_operands = 0 : i64, tpu.core_type = #tpu.core_type<tc>, window_params = [{transform_indices = @transform_0, window_bounds = array<i64: 16, 128>}, {pipeline_mode = #tpu.pipeline_mode<synchronous>, transform_indices = @transform_1, window_bounds = array<i64: 16, 128>}, {transform_indices = @transform_2, window_bounds = array<i64: 1, 16, 16>}, {transform_indices = @transform_3, window_bounds = array<i64: 1, 16, 16>}]} {
    %c0 = arith.constant 0 : index
    %c0_0 = arith.constant 0 : index
    %0 = vector.load %arg2[%c0, %c0_0] : memref<16x128xf32, #tpu.memory_space<vmem>>, vector<16x128xf32>
    %c0_1 = arith.constant 0 : index
    %c0_2 = arith.constant 0 : index
    %1 = vector.load %arg1[%c0_1, %c0_2] : memref<16x128xf32, #tpu.memory_space<vmem>>, vector<16x128xf32>
    %cst = arith.constant dense<0.000000e+00> : vector<16x16xf32>
    %2 = tpu.matmul %0, %1, %cst {dimension_numbers = #tpu.dot_dimension_numbers<[1], [1], [0], [0], [0, 0, 1, 0], [], []>} : vector<16x128xf32>, vector<16x128xf32>, vector<16x16xf32> -> vector<16x16xf32>
    %cst_3 = arith.constant dense<0xFF800000> : vector<16xf32>
    %3 = vector.multi_reduction <maximumf>, %2, %cst_3 [1] : vector<16x16xf32> to vector<16xf32>
    %4 = vector.shape_cast %3 : vector<16xf32> to vector<16x1xf32>
    %5 = vector.broadcast %4 : vector<16x1xf32> to vector<16x16xf32>
    %6 = arith.subf %2, %5 : vector<16x16xf32>
    %7 = math.exp %6 : vector<16x16xf32>
    %c0_4 = arith.constant 0 : index
    %c0_5 = arith.constant 0 : index
    %c0_6 = arith.constant 0 : index
    %8 = vector.load %arg3[%c0_4, %c0_5, %c0_6] : memref<1x16x16xi8, #tpu.memory_space<vmem>>, vector<1x16x16xi8>
    %9 = vector.shape_cast %8 : vector<1x16x16xi8> to vector<16x16xi8>
    %10 = arith.sitofp %9 : vector<16x16xi8> to vector<16x16xf32>
    %cst_7 = arith.constant 1.000000e-10 : f32
    %11 = vector.broadcast %cst_7 : f32 to vector<16x16xf32>
    %12 = arith.addf %10, %11 : vector<16x16xf32>
    %13 = arith.mulf %7, %12 : vector<16x16xf32>
    %cst_8 = arith.constant dense<0.000000e+00> : vector<16xf32>
    %14 = vector.multi_reduction <add>, %13, %cst_8 [1] : vector<16x16xf32> to vector<16xf32>
    %15 = vector.shape_cast %14 : vector<16xf32> to vector<16x1xf32>
    %16 = tpu.reciprocal %15 {approx = true} : vector<16x1xf32> -> vector<16x1xf32>
    %17 = arith.mulf %15, %16 : vector<16x1xf32>
    %cst_9 = arith.constant 2.000000e+00 : f32
    %18 = vector.broadcast %cst_9 : f32 to vector<16x1xf32>
    %19 = arith.subf %18, %17 : vector<16x1xf32>
    %20 = arith.mulf %16, %19 : vector<16x1xf32>
    %21 = vector.broadcast %20 : vector<16x1xf32> to vector<16x16xf32>
    %22 = arith.mulf %13, %21 : vector<16x16xf32>
    %23 = arith.mulf %22, %10 : vector<16x16xf32>
    %c0_10 = arith.constant 0 : index
    %c0_11 = arith.constant 0 : index
    %c0_12 = arith.constant 0 : index
    %24 = vector.load %arg4[%c0_10, %c0_11, %c0_12] : memref<1x16x16xf32, #tpu.memory_space<vmem>>, vector<1x16x16xf32>
    %25 = vector.shape_cast %24 : vector<1x16x16xf32> to vector<16x16xf32>
    %26 = vector.shape_cast %23 : vector<16x16xf32> to vector<1x16x16xf32>
    tpu.vector_store %arg4[%c0_10, %c0_11, %c0_12], %26 {strides = array<i32>} : memref<1x16x16xf32, #tpu.memory_space<vmem>>, vector<1x16x16xf32>,
    return
  }
  func.func @transform_0(%arg0: i32) -> (i32, i32) {
    %c0_i32 = arith.constant 0 : i32
    %c0_i32_0 = arith.constant 0 : i32
    return %c0_i32, %arg0 : i32, i32
  }
  func.func @transform_1(%arg0: i32) -> (i32, i32) {
    %c0_i32 = arith.constant 0 : i32
    %c0_i32_0 = arith.constant 0 : i32
    %c0_i32_1 = arith.constant 0 : i32
    return %c0_i32, %c0_i32_0 : i32, i32
  }
  func.func @transform_2(%arg0: i32) -> (i32, i32, i32) {
    %c0_i32 = arith.constant 0 : i32
    %c0_i32_0 = arith.constant 0 : i32
    %c0_i32_1 = arith.constant 0 : i32
    return %arg0, %c0_i32, %c0_i32_0 : i32, i32, i32
  }
  func.func @transform_3(%arg0: i32) -> (i32, i32, i32) {
    %c0_i32 = arith.constant 0 : i32
    %c0_i32_0 = arith.constant 0 : i32
    %c0_i32_1 = arith.constant 0 : i32
    return %arg0, %c0_i32, %c0_i32_0 : i32, i32, i32
  }
}

</mosaic_0001>

<llo_original>
// kernel: tpu_custom_call.1
$region0: #{tpu_custom_call.1}
  #allocation0 [shape = 'u32[]', space=smem, size = 0x4, offset = 0x4, fixed_abs, tag = 'smem constant byte address 0x4 - core index']
  #allocation1 [shape = 'u32[144,128]{1,0:T(1,128)}', space=vmem, size = 0x12000, scoped, tag = 'internal scratch']
  %s0 = inlined_call_operand.hbm [shape: f32[16,256], index: 0, kind: input, shape index: {}]
  %s1 = inlined_call_operand.hbm [shape: f32[16,128], index: 1, kind: input, shape index: {}]
  %s2 = inlined_call_operand.hbm [shape: s8[2,16,16], index: 2, kind: input, shape index: {}]
  %s3 = inlined_call_operand.hbm [shape: f32[2,16,16], index: 3, kind: output, shape index: {}]
  %s4 = sld [smem:[#allocation0]]
  $region57: #{tpu_custom_call.1} parent=0
    _
  %s6 = ssub.s32 1, %s4
  %s7 = scalar_select 0, %s6, %s4
  $region1: #{tpu_custom_call.1} parent=0
    #allocation2 [shape = 'u8[16384]{0}', space=vmem, size = 0x4000, scoped, tag = 'input window, operand 0']
    #allocation3 [shape = 's32[2]{0}', space=sflag, size = 0x8, scoped, tag = 'scoped memory for tpu_custom_call.1']
    #allocation4 [shape = 's32[2]{0}', space=sflag, size = 0x8, scoped, tag = 'scoped memory for tpu_custom_call.1']
    #allocation5 [shape = 'u8[8192]{0}', space=vmem, size = 0x2000, scoped, tag = 'input window, operand 1, single buffered']
    #allocation6 [shape = 's32[1]{0}', space=sflag, size = 0x4, scoped, tag = 'scoped memory for tpu_custom_call.1']
    #allocation7 [shape = 'u8[4096]{0}', space=vmem, size = 0x1000, scoped, tag = 'input window, operand 2']
    #allocation8 [shape = 'u8[16384]{0}', space=vmem, size = 0x4000, scoped, tag = 'output window, operand 0']
    %8 = vsyncpa [#allocation3], 0
    %s9 = scalar_lea.sflag [#allocation3], 1
    %10 = vsyncpa %s9, 0
    %11 = vsyncpa [#allocation6], 0
    %12 = vsyncpa [#allocation4], 0
    %s13 = scalar_lea.sflag [#allocation4], 1
    %14 = vsyncpa %s13, 0
    loop: start=0, step=1, limit=4
    $region2: #{tpu_custom_call.1} parent=1 // loop_pre_header
      _
    $region3: #{tpu_custom_call.1} parent=1 // loop_header
      %s16 = sphi 0, %s20
      %p17 = scmp.ge.s32.totalorder %s16, 4
      %s26 = sphi 0, %s28
      %s29 = sphi 0, %s26
      %s30 = sphi 0, %s29
      %s46 = sphi 0, %s30
      %s50 = sphi 0, %s50
      %s52 = sphi 0, %s50
      %s53 = sphi 0, %s52
      %s67 = sphi 0, %s53
      %s73 = sphi 0, %s75
      %s76 = sphi 0, %s73
      %s77 = sphi 0, %s76
      %s93 = sphi 0, %s77
      %s99 = sphi 0, %s101
      %s102 = sphi 0, %s99
      %s103 = sphi 0, %s102
      %s119 = sphi 0, %s103
    $region4: #{tpu_custom_call.1} parent=1 // loop_header_branch
      %19 = sbr.rel (%p17) target = $region8
    $region5: #{tpu_custom_call.1} parent=1 // loop_body
      %s21 = ssub.s32 %s16, 1
      %s22 = ssub.s32 %s16, 2
      %s23 = sadd.s32 %s16, 1
      %s24 = ssub.s32 %s16, %s23
      %p25 = scmp.eq.s32.totalorder %s24, 0
      %s27 = sadd.s32 %s26, 1
      %s28 = scalar_select %p25, %s26, %s27
      %p31 = pneg %p25
      %p32 = scmp.eq.s32.totalorder %s16, 1
      %p33 = por %p31, %p32
      %p34 = scmp.ne.s32.totalorder %s26, %s29
      %p35 = scmp.eq.s32.totalorder %s16, 0
      %p36 = por %p34, %p35
      %p37 = scmp.ne.s32.totalorder %s26, %s29
      %p38 = scmp.eq.s32.totalorder %s21, 1
      %p39 = por %p37, %p38
      %p40 = scmp.ne.s32.totalorder %s29, %s30
      %p41 = scmp.eq.s32.totalorder %s21, 0
      %p42 = por %p40, %p41
      %p43 = scmp.ne.s32.totalorder %s29, %s30
      %p44 = scmp.eq.s32.totalorder %s22, 1
      %p45 = por %p43, %p44
      %p47 = scmp.ne.s32.totalorder %s30, %s46
      %p48 = scmp.eq.s32.totalorder %s22, 0
      %p49 = por %p47, %p48
      %s51 = sadd.s32 %s50, 1
      %p54 = scmp.eq.s32.totalorder %s16, 1
      %p55 = scmp.ne.s32.totalorder %s50, %s52
      %p56 = scmp.eq.s32.totalorder %s16, 0
      %p57 = por %p55, %p56
      %p58 = scmp.ne.s32.totalorder %s50, %s52
      %p59 = scmp.eq.s32.totalorder %s21, 1
      %p60 = por %p58, %p59
      %p61 = scmp.ne.s32.totalorder %s52, %s53
      %p62 = scmp.eq.s32.totalorder %s21, 0
      %p63 = por %p61, %p62
      %p64 = scmp.ne.s32.totalorder %s52, %s53
      %p65 = scmp.eq.s32.totalorder %s22, 1
      %p66 = por %p64, %p65
      %p68 = scmp.ne.s32.totalorder %s53, %s67
      %p69 = scmp.eq.s32.totalorder %s22, 0
      %p70 = por %p68, %p69
      %s71 = ssub.s32 %s16, %s23
      %p72 = scmp.eq.s32.totalorder %s71, 0
      %s74 = sadd.s32 %s73, 1
      %s75 = scalar_select %p72, %s73, %s74
      %p78 = pneg %p72
      %p79 = scmp.eq.s32.totalorder %s16, 1
      %p80 = por %p78, %p79
      %p81 = scmp.ne.s32.totalorder %s73, %s76
      %p82 = scmp.eq.s32.totalorder %s16, 0
      %p83 = por %p81, %p82
      %p84 = scmp.ne.s32.totalorder %s73, %s76
      %p85 = scmp.eq.s32.totalorder %s21, 1
      %p86 = por %p84, %p85
      %p87 = scmp.ne.s32.totalorder %s76, %s77
      %p88 = scmp.eq.s32.totalorder %s21, 0
      %p89 = por %p87, %p88
      %p90 = scmp.ne.s32.totalorder %s76, %s77
      %p91 = scmp.eq.s32.totalorder %s22, 1
      %p92 = por %p90, %p91
      %p94 = scmp.ne.s32.totalorder %s77, %s93
      %p95 = scmp.eq.s32.totalorder %s22, 0
      %p96 = por %p94, %p95
      %s97 = ssub.s32 %s16, %s23
      %p98 = scmp.eq.s32.totalorder %s97, 0
      %s100 = sadd.s32 %s99, 1
      %s101 = scalar_select %p98, %s99, %s100
      %p104 = pneg %p98
      %p105 = scmp.eq.s32.totalorder %s16, 1
      %p106 = por %p104, %p105
      %p107 = scmp.ne.s32.totalorder %s99, %s102
      %p108 = scmp.eq.s32.totalorder %s16, 0
      %p109 = por %p107, %p108
      %p110 = scmp.ne.s32.totalorder %s99, %s102
      %p111 = scmp.eq.s32.totalorder %s21, 1
      %p112 = por %p110, %p111
      %p113 = scmp.ne.s32.totalorder %s102, %s103
      %p114 = scmp.eq.s32.totalorder %s21, 0
      %p115 = por %p113, %p114
      %p116 = scmp.ne.s32.totalorder %s102, %s103
      %p117 = scmp.eq.s32.totalorder %s22, 1
      %p118 = por %p116, %p117
      %p120 = scmp.ne.s32.totalorder %s103, %s119
      %p121 = scmp.eq.s32.totalorder %s22, 0
      %p122 = por %p120, %p121
      %p123 = scmp.le.s32.totalorder 1, %s16
      %p124 = scmp.lt.s32.totalorder %s16, 3
      %p125 = pnand %p123, %p124
      %p126 = pneg %p125
      // Predicated region
      $region9: #{tpu_custom_call.1} parent=5 // pred_check
        _
      $region10: #{tpu_custom_call.1} parent=5 // pred_check_branch
        %128 = sbr.rel (%p125) target = $region12
      $region11: #{tpu_custom_call.1} parent=5 // pred_region
        %s129 = ssub.s32 %s16, 1
        // Predicated region
        $region13: #{tpu_custom_call.1} parent=11 // pred_check
          %p130 = pneg %p63
        $region14: #{tpu_custom_call.1} parent=11 // pred_check_branch
          %132 = sbr.rel (%p130) target = $region16
        $region15: #{tpu_custom_call.1} parent=11 // pred_region
          %s134 = ssub.s32 256, 256
          %135 = vsyncadd [#allocation6], %s134
          %s136 = sshll.u32 [#allocation5], 4
          %s137 = int_to_ptr.vmem [resolvable:$true] %s136
          %142 = dma.hbm_to_vmem [thread:$0]  %s1, 256, %s137, [#allocation6], 128, 128, 8
        $region16: #{tpu_custom_call.1} parent=11 // pred_fallthru
          _
      $region12: #{tpu_custom_call.1} parent=5 // pred_fallthru
        _
      %p143 = scmp.lt.s32.totalorder %s16, 2
      // Predicated region
      $region17: #{tpu_custom_call.1} parent=5 // pred_check
        %p144 = pneg %p143
      $region18: #{tpu_custom_call.1} parent=5 // pred_check_branch
        %146 = sbr.rel (%p144) target = $region20
      $region19: #{tpu_custom_call.1} parent=5 // pred_region
        // Predicated region
        $region21: #{tpu_custom_call.1} parent=19 // pred_check
          %p147 = pneg %p36
        $region22: #{tpu_custom_call.1} parent=19 // pred_check_branch
          %149 = sbr.rel (%p147) target = $region24
        $region23: #{tpu_custom_call.1} parent=19 // pred_region
          %s150 = sand.u32 %s16, 1
          %s151 = scalar_lea.sflag [#allocation3], %s150
          %s152 = sand.u32 %s26, 1
          %s153 = smul.addr %s152, 16
          %s154 = scalar_lea.vmem [#allocation2], %s153
          %s156 = ssub.s32 256, 256
          %157 = vsyncadd %s151, %s156
          %s158 = smul.addr %s16, 128
          %s159 = scalar_lea.hbm %s0, %s158
          %s160 = sshll.u32 %s154, 4
          %s161 = int_to_ptr.vmem [resolvable:$true] %s160
          %166 = dma.hbm_to_vmem [thread:$0]  %s159, 256, %s161, %s151, 256, 128, 8
        $region24: #{tpu_custom_call.1} parent=19 // pred_fallthru
          _
        // Predicated region
        $region25: #{tpu_custom_call.1} parent=19 // pred_check
          %p167 = pneg %p83
        $region26: #{tpu_custom_call.1} parent=19 // pred_check_branch
          %169 = sbr.rel (%p167) target = $region28
        $region27: #{tpu_custom_call.1} parent=19 // pred_region
          %s170 = sand.u32 %s16, 1
          %s171 = scalar_lea.sflag [#allocation3], %s170
          %s172 = sand.u32 %s73, 1
          %s173 = smul.addr %s172, 4
          %s174 = scalar_lea.vmem [#allocation7], %s173
          %s176 = ssub.s32 64, 64
          %177 = vsyncadd %s171, %s176
          %s178 = smul.addr %s16, 2
          %s179 = smul.addr %s178, 32
          %s180 = scalar_lea.hbm %s2, %s179
          %s181 = sshll.u32 %s174, 4
          %s182 = int_to_ptr.vmem [resolvable:$true] %s181
          %187 = dma.hbm_to_vmem [thread:$0]  %s180, 64, %s182, %s171, 32, 32, 2
        $region28: #{tpu_custom_call.1} parent=19 // pred_fallthru
          _
      $region20: #{tpu_custom_call.1} parent=5 // pred_fallthru
        _
      %p188 = scmp.le.s32.totalorder 1, %s16
      %p189 = scmp.lt.s32.totalorder %s16, 3
      %p190 = pnand %p188, %p189
      %p191 = pneg %p190
      // Predicated region
      $region29: #{tpu_custom_call.1} parent=5 // pred_check
        _
      $region30: #{tpu_custom_call.1} parent=5 // pred_check_branch
        %193 = sbr.rel (%p190) target = $region32
      $region31: #{tpu_custom_call.1} parent=5 // pred_region
        %s194 = ssub.s32 %s16, 1
        %s195 = sand.u32 %s21, 1
        %s196 = scalar_lea.sflag [#allocation3], %s195
        %s197 = sand.u32 %s29, 1
        %s198 = smul.addr %s197, 16
        %s199 = scalar_lea.vmem [#allocation2], %s198
        // Predicated region
        $region33: #{tpu_custom_call.1} parent=31 // pred_check
          %p200 = pneg %p42
        $region34: #{tpu_custom_call.1} parent=31 // pred_check_branch
          %202 = sbr.rel (%p200) target = $region36
        $region35: #{tpu_custom_call.1} parent=31 // pred_region
          %203 = dma.done %s196, 256
        $region36: #{tpu_custom_call.1} parent=31 // pred_fallthru
          _
        // Predicated region
        $region37: #{tpu_custom_call.1} parent=31 // pred_check
          %p204 = pneg %p63
        $region38: #{tpu_custom_call.1} parent=31 // pred_check_branch
          %206 = sbr.rel (%p204) target = $region40
        $region39: #{tpu_custom_call.1} parent=31 // pred_region
          %207 = dma.done [#allocation6], 256
        $region40: #{tpu_custom_call.1} parent=31 // pred_fallthru
          _
        %s208 = sand.u32 %s21, 1
        %s209 = scalar_lea.sflag [#allocation3], %s208
        %s210 = sand.u32 %s76, 1
        %s211 = smul.addr %s210, 4
        %s212 = scalar_lea.vmem [#allocation7], %s211
        // Predicated region
        $region41: #{tpu_custom_call.1} parent=31 // pred_check
          %p213 = pneg %p89
        $region42: #{tpu_custom_call.1} parent=31 // pred_check_branch
          %215 = sbr.rel (%p213) target = $region44
        $region43: #{tpu_custom_call.1} parent=31 // pred_region
          %216 = dma.done %s209, 64
        $region44: #{tpu_custom_call.1} parent=31 // pred_fallthru
          _
        %s217 = sand.u32 %s21, 1
        %s218 = scalar_lea.sflag [#allocation3], %s217
        %s219 = sand.u32 %s29, 1
        %s220 = smul.addr %s219, 16
        %s221 = scalar_lea.vmem [#allocation2], %s220
        %p222 = pneg %p42
        %p223 = pneg %p39
        %p224 = pneg %p63
        %p225 = pneg %p60
        %s226 = sand.u32 %s21, 1
        %s227 = scalar_lea.sflag [#allocation3], %s226
        %s228 = sand.u32 %s76, 1
        %s229 = smul.addr %s228, 4
        %s230 = scalar_lea.vmem [#allocation7], %s229
        %p231 = pneg %p89
        %p232 = pneg %p86
        %p233 = pneg %p115
        %p234 = pneg %p112
        %s235 = sand.u32 %s102, 1
        %s236 = scalar_lea.sflag [#allocation4], %s235
        %s237 = sand.u32 %s102, 1
        %s238 = smul.addr %s237, 16
        %s239 = scalar_lea.vmem [#allocation8], %s238
        %v240 = vld [vmem:[#allocation5] sm:$0xff]
        %v241 = vld [vmem:[#allocation5 + $0x8] sm:$0xff]
        %v242 = vld [vmem:[%s199] sm:$0xff]
        %v243 = vld [vmem:[%s199 + $0x8] sm:$0xff]
        %244 = vmatprep.subr.mxu0 0.0
        %245 = vmatpush1.xpose.msra.mxu0 %v242
        %246 = vmatprep.subr.mxu0 0.0
        %247 = vmatpush1.xpose.msra.mxu0 %v243
        %248 = vmatprep.subr.mxu0 0.0
        %249 = vmatpush1.xpose.msra.mxu0 0.0
        %250 = vmatprep.subr.mxu0 0.0
        %251 = vmatpush1.xpose.msra.mxu0 0.0
        %252 = vmatprep.subr.mxu0 0.0
        %253 = vmatpush1.xpose.msra.mxu0 0.0
        %254 = vmatprep.subr.mxu0 0.0
        %255 = vmatpush1.xpose.msra.mxu0 0.0
        %256 = vmatprep.subr.mxu0 0.0
        %257 = vmatpush1.xpose.msra.mxu0 0.0
        %258 = vmatprep.subr.mxu0 0.0
        %259 = vmatpush1.xpose.msra.mxu0 0.0
        %260 = vmatprep.subr.mxu0 0.0
        %261 = vmatpush1.xpose.msra.mxu0 0.0
        %262 = vmatprep.subr.mxu0 0.0
        %263 = vmatpush1.xpose.msra.mxu0 0.0
        %264 = vmatprep.subr.mxu0 0.0
        %265 = vmatpush1.xpose.msra.mxu0 0.0
        %266 = vmatprep.subr.mxu0 0.0
        %267 = vmatpush1.xpose.msra.mxu0 0.0
        %268 = vmatprep.subr.mxu0 0.0
        %269 = vmatpush1.xpose.msra.mxu0 0.0
        %270 = vmatprep.subr.mxu0 0.0
        %271 = vmatpush1.xpose.msra.mxu0 0.0
        %272 = vmatprep.subr.mxu0 0.0
        %273 = vmatpush1.xpose.msra.mxu0 0.0
        %274 = vmatprep.subr.mxu0 0.0
        %275 = vmatpush1.xpose.msra.mxu0 0.0
        %276 = vmatprep.subr.mxu0 0.0
        %277 = vmatpush1.xpose.msra.mxu0 0.0
        %278 = vmatprep.subr.mxu0 0.0
        %279 = vmatpush1.xpose.msra.mxu0 0.0
        %280 = vmatprep.subr.mxu0 0.0
        %281 = vmatpush1.xpose.msra.mxu0 0.0
        %282 = vmatprep.subr.mxu0 0.0
        %283 = vmatpush1.xpose.msra.mxu0 0.0
        %284 = vmatprep.subr.mxu0 0.0
        %285 = vmatpush1.xpose.msra.mxu0 0.0
        %286 = vmatprep.subr.mxu0 0.0
        %287 = vmatpush1.xpose.msra.mxu0 0.0
        %288 = vmatprep.subr.mxu0 0.0
        %289 = vmatpush1.xpose.msra.mxu0 0.0
        %290 = vmatprep.subr.mxu0 0.0
        %291 = vmatpush1.xpose.msra.mxu0 0.0
        %292 = vmatprep.subr.mxu0 0.0
        %293 = vmatpush1.xpose.msra.mxu0 0.0
        %294 = vmatprep.subr.mxu0 0.0
        %295 = vmatpush1.xpose.msra.mxu0 0.0
        %296 = vmatprep.subr.mxu0 0.0
        %297 = vmatpush1.xpose.msra.mxu0 0.0
        %298 = vmatprep.subr.mxu0 0.0
        %299 = vmatpush1.xpose.msra.mxu0 0.0
        %300 = vmatprep.subr.mxu0 0.0
        %301 = vmatpush1.xpose.msra.mxu0 0.0
        %302 = vmatprep.subr.mxu0 0.0
        %303 = vmatpush1.xpose.msra.mxu0 0.0
        %304 = vmatprep.subr.mxu0 0.0
        %305 = vmatpush1.xpose.msra.mxu0 0.0
        %306 = vmatprep.subr.mxu0 0.0
        %307 = vmatpush1.xpose.msra.mxu0 0.0
        %308 = vmatprep.mubr.f32.mxu0 0.0
        %309 = vmatmul.mubr.f32.gmra.mrb[0].mxu0 %v240
        %v310 = vpop.f32.mrb[0].mxu0
        %v311 = vadd.f32 0.0, %v310
        %v312 = vpop.f32.mrb[0].mxu0
        %313 = vmatprep.mubr.f32.mxu0 0.0
        %314 = vmatmul.mubr.f32.gmra.mrb[0].mxu0 %v241
        %v315 = vpop.f32.mrb[0].mxu0
        %v316 = vadd.f32 0.0, %v315
        %v317 = vpop.f32.mrb[0].mxu0
        %318 = vdwg.mxu0
        %vm319 = vcmask 130048
        %v320 = vsel %vm319, %v311, -inf
        %321 = vmax.xlane.f32.xlu0 %v320
        %v322 = vpop.xlane.xlu0 %321
        %v323 = vsel %vm319, %v316, -inf
        %324 = vmax.xlane.f32.xlu0 %v323
        %v325 = vpop.xlane.xlu0 %324
        %v326 = vsub.f32 %v311, %v322
        %v327 = vsub.f32 %v316, %v325
        %v328 = vmul.f32 %v326, 1.442695
        %v329 = vpow.pop %v328
        %v330 = vmul.f32 %v327, 1.442695
        %v331 = vpow.pop %v330
        %v332 = vld [vmem:[%s212] sm:$0x3]
        %v333 = vld [vmem:[%s212 + $0x2] sm:$0x3]
        %v334 = vunpack.c.0.s8 %v332
        %v335 = vunpack.c.0.s8 %v333
        %v336 = vcvt.s32.f32 %v334
        %v337 = vcvt.s32.f32 %v335
        %v338 = vadd.f32 %v336, 1e-10
        %v339 = vadd.f32 %v337, 1e-10
        %v340 = vmul.f32 %v329, %v338
        %v341 = vmul.f32 %v331, %v339
        %v342 = vsel %vm319, %v340, 0.0
        %343 = vadd.xlane.f32.xlu0 %v342
        %v344 = vpop.xlane.xlu0 %343
        %v345 = vsel %vm319, %v341, 0.0
        %346 = vadd.xlane.f32.xlu0 %v345
        %v347 = vpop.xlane.xlu0 %346
        %v348 = vrcp.pop %v344
        %v349 = vrcp.pop %v347
        %v350 = vmul.f32 %v344, %v348
        %v351 = vmul.f32 %v347, %v349
        %v352 = vsub.f32 2.0, %v350
        %v353 = vsub.f32 2.0, %v351
        %v354 = vmul.f32 %v348, %v352
        %v355 = vmul.f32 %v349, %v353
        %v356 = vmul.f32 %v340, %v354
        %v357 = vmul.f32 %v341, %v355
        %v358 = vmul.f32 %v356, %v336
        %v359 = vmul.f32 %v357, %v337
        %360 = vst.msk [vmem:[%s239] sm:$0xff] %vm319, %v358
        %361 = vst.msk [vmem:[%s239 + $0x8] sm:$0xff] %vm319, %v359
        %s362 = sand.u32 %s102, 1
        %s363 = scalar_lea.sflag [#allocation4], %s362
        %s364 = sand.u32 %s102, 1
        %s365 = smul.addr %s364, 16
        %s366 = scalar_lea.vmem [#allocation8], %s365
        // Predicated region
        $region45: #{tpu_custom_call.1} parent=31 // pred_check
          %p367 = pneg %p112
        $region46: #{tpu_custom_call.1} parent=31 // pred_check_branch
          %369 = sbr.rel (%p367) target = $region48
        $region47: #{tpu_custom_call.1} parent=31 // pred_region
          %s371 = ssub.s32 256, 256
          %372 = vsyncadd %s363, %s371
          %s373 = smul.addr %s21, 2
          %s374 = smul.addr %s373, 128
          %s375 = scalar_lea.hbm %s3, %s374
          %s376 = sshll.u32 %s366, 4
          %s377 = int_to_ptr.vmem [resolvable:$true] %s376
          %382 = dma.vmem_to_hbm [thread:$0]  %s377, 256, %s375, %s363, 128, 128, 8
        $region48: #{tpu_custom_call.1} parent=31 // pred_fallthru
          _
      $region32: #{tpu_custom_call.1} parent=5 // pred_fallthru
        _
      %p383 = scmp.le.s32.totalorder 2, %s16
      // Predicated region
      $region49: #{tpu_custom_call.1} parent=5 // pred_check
        %p384 = pneg %p383
      $region50: #{tpu_custom_call.1} parent=5 // pred_check_branch
        %386 = sbr.rel (%p384) target = $region52
      $region51: #{tpu_custom_call.1} parent=5 // pred_region
        %s387 = ssub.s32 %s16, 2
        // Predicated region
        $region53: #{tpu_custom_call.1} parent=51 // pred_check
          %p388 = pneg %p118
        $region54: #{tpu_custom_call.1} parent=51 // pred_check_branch
          %390 = sbr.rel (%p388) target = $region56
        $region55: #{tpu_custom_call.1} parent=51 // pred_region
          %s391 = sand.u32 %s103, 1
          %s392 = scalar_lea.sflag [#allocation4], %s391
          %s393 = sand.u32 %s103, 1
          %s394 = smul.addr %s393, 16
          %s395 = scalar_lea.vmem [#allocation8], %s394
          %396 = dma.done %s392, 256
        $region56: #{tpu_custom_call.1} parent=51 // pred_fallthru
          _
      $region52: #{tpu_custom_call.1} parent=5 // pred_fallthru
        _
    $region6: #{tpu_custom_call.1} parent=1 // loop_footer
      %s20 = sadd.s32 1, %s16
    $region7: #{tpu_custom_call.1} parent=1 // loop_footer_branch
      %15 = sbr.rel target = $region3
    $region8: #{tpu_custom_call.1} parent=1 // loop_exit
      _
    %397 = vsyncpa [#allocation3], 1
    %s398 = scalar_lea.sflag [#allocation3], 1
    %399 = vsyncpa %s398, 1
    %400 = vsyncpa [#allocation6], 1
    %401 = vsyncpa [#allocation4], 1
    %s402 = scalar_lea.sflag [#allocation4], 1
    %403 = vsyncpa %s402, 1

</llo_original>
